<compile_context>
chip_gen: v5e
topology: v5e:2x2
jax: 0.10.0
libtpu: 0.0.40
codegen_flags: <defaults>
</compile_context>

<pallas_src>
import jax
import jax.numpy as jnp
from jax.experimental import pallas as pl
from jax.experimental.pallas import tpu as pltpu

_MIB = 2 ** 20


def _round_up(x, m):
    return (x + m - 1) // m * m


def _vmem_capacity_bytes():
    try:
        return int(pltpu.get_tpu_info().vmem_capacity_bytes)
    except Exception:
        return 64 * _MIB          # conservative fallback (v7x per-core VMEM)


def _budget():
    cap = _vmem_capacity_bytes()
    # ~48 MiB usable on 64 MiB parts (v7x), ~96 MiB on 128 MiB parts (v5e/v6e).
    return cap, cap - max(16 * _MIB, cap // 4)


# --------------------------------------------------------------------------- #
# Kernels
# --------------------------------------------------------------------------- #

def _vl_resident_kernel(x_ref, w_ref, b_ref, o_ref, m_ref, l_ref):
    """Fused matmul + online log-sum-exp; (TM, Vp) output block VMEM-resident."""
    j = pl.program_id(1)
    nj = pl.num_programs(1)
    tn = w_ref.shape[1]

    @pl.when(j == 0)
    def _init():
        m_ref[...] = jnp.full_like(m_ref, -jnp.inf)
        l_ref[...] = jnp.zeros_like(l_ref)

    # Cast activations to the (bf16) weight dtype in-kernel: no wrapper-side
    # pad/cast pass over x, f32 accumulation on the MXU.
    x_blk = x_ref[...].astype(w_ref.dtype)
    logits = jnp.dot(x_blk, w_ref[...],
                     preferred_element_type=jnp.float32) + b_ref[...]

    # Online log-sum-exp across vocab tiles.
    m_prev = m_ref[...]
    m_new = jnp.maximum(m_prev, jnp.max(logits, axis=-1, keepdims=True))
    alpha = jnp.exp(m_prev - m_new)                  # == 0 on the first tile
    l_ref[...] = alpha * l_ref[...] + jnp.sum(jnp.exp(logits - m_new),
                                              axis=-1, keepdims=True)
    m_ref[...] = m_new

    # Stash the raw logits into the resident output row block.
    col = pl.multiple_of(j * tn, tn)
    o_ref[:, pl.ds(col, tn)] = logits.astype(o_ref.dtype)

    # Last vocab tile: normalize the whole row block in place.
    @pl.when(j == nj - 1)
    def _finalize():
        lse = m_ref[...] + jnp.log(l_ref[...])
        o_ref[...] = (o_ref[...].astype(jnp.float32) - lse).astype(o_ref.dtype)


def _vl_stream_kernel(x_ref, w_ref, b_ref, o_ref, lse_ref, m_ref, l_ref):
    """Matmul + online LSE; raw logit blocks streamed to HBM, per-row LSE out."""
    j = pl.program_id(1)
    nj = pl.num_programs(1)

    @pl.when(j == 0)
    def _init():
        m_ref[...] = jnp.full_like(m_ref, -jnp.inf)
        l_ref[...] = jnp.zeros_like(l_ref)

    x_blk = x_ref[...].astype(w_ref.dtype)
    logits = jnp.dot(x_blk, w_ref[...],
                     preferred_element_type=jnp.float32) + b_ref[...]

    m_prev = m_ref[...]
    m_new = jnp.maximum(m_prev, jnp.max(logits, axis=-1, keepdims=True))
    alpha = jnp.exp(m_prev - m_new)
    l_ref[...] = alpha * l_ref[...] + jnp.sum(jnp.exp(logits - m_new),
                                              axis=-1, keepdims=True)
    m_ref[...] = m_new

    o_ref[...] = logits.astype(o_ref.dtype)

    @pl.when(j == nj - 1)
    def _finalize():
        lse_ref[...] = m_ref[...] + jnp.log(l_ref[...])


def _vl_norm_kernel(raw_ref, lse_ref, o_ref):
    """Second, mem-bound pass for the streaming path: out = raw - lse."""
    o_ref[...] = (raw_ref[...].astype(jnp.float32)
                  - lse_ref[...]).astype(o_ref.dtype)


# --------------------------------------------------------------------------- #
# Tiling / VMEM planning
# --------------------------------------------------------------------------- #

def _choose_tn(Ep, V, tile_cols, w_itemsize, budget):
    """Lane-dense V tile; shrink while the double-buffered (Ep, TN) weight tile
    would eat more than half the VMEM budget (large E / v7x)."""
    tn = min(_round_up(tile_cols, 128), _round_up(V, 128))
    while tn > 128 and 2 * Ep * tn * w_itemsize > budget // 2:
        tn = _round_up(tn // 2, 128)
    return tn


def _choose_rows_plan(rows, Ep, tn, Vp, *, x_itemsize, w_itemsize, out_itemsize,
                      tile_rows, streaming, vmem_cap, budget):
    # Row tile: multiple of 128 (not 8) -> clean packed-sublane / MXU passes.
    tm = min(_round_up(tile_rows, 128), _round_up(rows, 128))

    def fixed_b(t):
        return (2 * t * Ep * x_itemsize        # x blocks (double-buffered)
                + 2 * Ep * tn * w_itemsize     # weight blocks
                + 2 * tn * 4                   # bias blocks
                + 2 * t * 4)                   # m / l scratch

    def resident_b(t):
        return fixed_b(t) + 2 * t * Vp * out_itemsize

    def stream_b(t):
        return fixed_b(t) + 2 * t * tn * 4 + 2 * t * 4

    if streaming is None:
        # Keep the fused single-pass path only when the resident row block
        # fits at the full TM target; otherwise stream (big vocab).
        streaming = resident_b(tm) > budget
    cost = stream_b if streaming else resident_b
    while tm > 128 and cost(tm) > budget:
        tm = _round_up(tm // 2, 128)

    # 64 MiB parts (v7x) have two TensorCores per chip: make sure the
    # "parallel" row axis has >= 2 steps when the row count allows it.
    if vmem_cap <= 80 * _MIB and _round_up(rows, tm) // tm == 1 and tm > 128:
        tm_half = _round_up(tm // 2, 128)
        if _round_up(rows, tm_half) // tm_half >= 2:
            tm = tm_half

    rows_p = _round_up(rows, tm)
    needed = cost(tm)
    vmem_limit = int(max(16 * _MIB, min(vmem_cap - 8 * _MIB, needed + 16 * _MIB)))
    return tm, rows_p, bool(streaming), vmem_limit


def _prepare_weight(w, b, Ep, Vp, w_dtype):
    """Pad/cast W and b; no-ops when already the right shape/dtype."""
    E, V = w.shape
    if w.shape == (Ep, Vp):
        w2 = w if w.dtype == w_dtype else w.astype(w_dtype)
    else:
        w2 = jnp.zeros((Ep, Vp), w_dtype).at[:E, :V].set(w.astype(w_dtype))
    # Padded vocab columns get a large *finite* negative bias so exp() == 0
    # without creating inf - inf in the online LSE.
    if V == Vp:
        b2 = b.astype(jnp.float32).reshape(1, Vp)
    else:
        b2 = jnp.full((1, Vp), -1e30, jnp.float32).at[0, :V].set(
            b.astype(jnp.float32))
    return w2, b2


# --------------------------------------------------------------------------- #
# Wrappers
# --------------------------------------------------------------------------- #

def _vocab_logits_prepared(x, w2, b2, V, tn, *, tile_rows, out_dtype, streaming):
    """x: (..., E); w2: (Ep, Vp) prepared weight; b2: (1, Vp) f32 bias."""
    *lead, E = x.shape
    rows = 1
    for d in lead:
        rows *= d
    Ep, Vp = w2.shape
    assert E <= Ep and V <= Vp and Vp % tn == 0

    vmem_cap, budget = _budget()
    tm, rows_p, streaming, vmem_limit = _choose_rows_plan(
        rows, Ep, tn, Vp,
        x_itemsize=jnp.dtype(x.dtype).itemsize,
        w_itemsize=jnp.dtype(w2.dtype).itemsize,
        out_itemsize=jnp.dtype(out_dtype).itemsize,
        tile_rows=tile_rows, streaming=streaming,
        vmem_cap=vmem_cap, budget=budget)

    # Pad x only when needed (rows to a tile multiple, E to a lane-dense
    # contraction dim).  dtype is preserved: the bf16 cast happens in-kernel.
    x2 = x.reshape(rows, E)
    if (rows, E) != (rows_p, Ep):
        x2 = jnp.zeros((rows_p, Ep), x.dtype).at[:rows, :E].set(x2)

    nr, nv = rows_p // tm, Vp // tn

    if not streaming:
        out_p = pl.pallas_call(
            _vl_resident_kernel,
            out_shape=jax.ShapeDtypeStruct((rows_p, Vp), out_dtype),
            grid_spec=pltpu.PrefetchScalarGridSpec(
                num_scalar_prefetch=0,
                grid=(nr, nv),
                in_specs=[
                    pl.BlockSpec((tm, Ep), lambda i, j: (i, 0)),   # activations
                    pl.BlockSpec((Ep, tn), lambda i, j: (0, j)),   # weight tile
                    pl.BlockSpec((1, tn), lambda i, j: (0, j)),    # bias tile
                ],
                out_specs=pl.BlockSpec((tm, Vp), lambda i, j: (i, 0)),
                scratch_shapes=[pltpu.VMEM((tm, 1), jnp.float32),   # running max
                                pltpu.VMEM((tm, 1), jnp.float32)],  # running sum
            ),
            compiler_params=pltpu.CompilerParams(
                dimension_semantics=("parallel", "arbitrary"),
                vmem_limit_bytes=vmem_limit),
        )(x2, w2, b2)
    else:
        raw, lse = pl.pallas_call(
            _vl_stream_kernel,
            out_shape=(jax.ShapeDtypeStruct((rows_p, Vp), jnp.float32),
                       jax.ShapeDtypeStruct((rows_p, 1), jnp.float32)),
            grid_spec=pltpu.PrefetchScalarGridSpec(
                num_scalar_prefetch=0,
                grid=(nr, nv),
                in_specs=[
                    pl.BlockSpec((tm, Ep), lambda i, j: (i, 0)),
                    pl.BlockSpec((Ep, tn), lambda i, j: (0, j)),
                    pl.BlockSpec((1, tn), lambda i, j: (0, j)),
                ],
                out_specs=[
                    pl.BlockSpec((tm, tn), lambda i, j: (i, j)),   # raw logits
                    pl.BlockSpec((tm, 1), lambda i, j: (i, 0)),    # per-row LSE
                ],
                scratch_shapes=[pltpu.VMEM((tm, 1), jnp.float32),
                                pltpu.VMEM((tm, 1), jnp.float32)],
            ),
            compiler_params=pltpu.CompilerParams(
                dimension_semantics=("parallel", "arbitrary"),
                vmem_limit_bytes=vmem_limit),
        )(x2, w2, b2)

        # Tiny second pass: normalize streamed raw logits.
        out_p = pl.pallas_call(
            _vl_norm_kernel,
            out_shape=jax.ShapeDtypeStruct((rows_p, Vp), out_dtype),
            grid_spec=pltpu.PrefetchScalarGridSpec(
                num_scalar_prefetch=0,
                grid=(nr, nv),
                in_specs=[
                    pl.BlockSpec((tm, tn), lambda i, j: (i, j)),
                    pl.BlockSpec((tm, 1), lambda i, j: (i, 0)),
                ],
                out_specs=pl.BlockSpec((tm, tn), lambda i, j: (i, j)),
            ),
            compiler_params=pltpu.CompilerParams(
                dimension_semantics=("parallel", "parallel"),
                vmem_limit_bytes=vmem_limit),
        )(raw, lse)

    return out_p[:rows, :V].reshape(*lead, V)


def make_vocab_logits_fn(w, b, *, tile_rows=512, tile_cols=1024,
                         out_dtype=jnp.float32, use_bf16=True, streaming=None):
    """Pad + bf16-cast the weight ONCE (hoisted out of the per-call path) and
    return fn(x) -> log_softmax(x @ w + b, axis=-1)."""
    E, V = w.shape
    assert b.shape == (V,)
    w_dtype = jnp.bfloat16 if use_bf16 else w.dtype
    _, budget = _budget()
    Ep = _round_up(E, 128)
    tn = _choose_tn(Ep, V, tile_cols, jnp.dtype(w_dtype).itemsize, budget)
    Vp = _round_up(V, tn)
    w2, b2 = _prepare_weight(w, b, Ep, Vp, w_dtype)

    def fn(x):
        return _vocab_logits_prepared(x, w2, b2, V, tn, tile_rows=tile_rows,
                                      out_dtype=out_dtype, streaming=streaming)
    return fn


def vocab_logits(x, w, b, *, tile_rows=512, tile_cols=1024,
                 out_dtype=jnp.float32, use_bf16=True, streaming=None):
    """One-shot convenience wrapper: log_softmax(x @ w + b, axis=-1)."""
    return make_vocab_logits_fn(w, b, tile_rows=tile_rows, tile_cols=tile_cols,
                                out_dtype=out_dtype, use_bf16=use_bf16,
                                streaming=streaming)(x)


# --------------------------------------------------------------------------- #
# Self-test
# --------------------------------------------------------------------------- #

if __name__ == "__main__":
    # Shapes consistent with the module: (batch, seq, embed_dim) -> logit_dim.
    batch, seq, embed_dim, logit_dim = 2, 8, 32, 128

    key = jax.random.PRNGKey(0)
    kx, kw, kb = jax.random.split(key, 3)

    x = jax.random.normal(kx, (batch, seq, embed_dim), dtype=jnp.float32)
    bound = 1.0 / (embed_dim ** 0.5)
    w = jax.random.uniform(kw, (embed_dim, logit_dim), jnp.float32, -bound, bound)
    b = jax.random.uniform(kb, (logit_dim,), jnp.float32, -bound, bound)

    # Prepared-weight path: pad/cast of W hoisted out of the per-call path.
    vl = make_vocab_logits_fn(w, b)
    out = vl(x)
    jax.block_until_ready(out)

    ref = jax.nn.log_softmax(x @ w + b, axis=-1)
    assert out.shape == (batch, seq, logit_dim)
    assert out.dtype == jnp.float32
    # bf16 MXU operands (f32 accumulation) vs f32 reference -> loose tolerance.
    assert jnp.allclose(out, ref, atol=3e-2, rtol=3e-2), "mismatch (resident)"

    # Ragged shapes: row/E padding + multi-tile online LSE over V.
    b2_, s2_, e2_, v2_ = 2, 5, 48, 200
    k1, k2, k3 = jax.random.split(jax.random.PRNGKey(1), 3)
    x_b = jax.random.normal(k1, (b2_, s2_, e2_), dtype=jnp.float32)
    bb = 1.0 / (e2_ ** 0.5)
    w_b = jax.random.uniform(k2, (e2_, v2_), jnp.float32, -bb, bb)
    b_b = jax.random.uniform(k3, (v2_,), jnp.float32, -bb, bb)

    out_b = vocab_logits(x_b, w_b, b_b, tile_cols=128)     # 2 vocab tiles
    jax.block_until_ready(out_b)
    ref_b = jax.nn.log_softmax(x_b @ w_b + b_b, axis=-1)
    assert out_b.shape == (b2_, s2_, v2_)
    assert jnp.allclose(out_b, ref_b, atol=3e-2, rtol=3e-2), "mismatch (tiled V)"

    # Streaming (large-vocab) path: raw-logit blocks + per-row LSE, then a
    # second normalization pass.
    v3_ = 384
    k4, k5, k6 = jax.random.split(jax.random.PRNGKey(2), 3)
    x_c = jax.random.normal(k4, (batch, seq, embed_dim), dtype=jnp.float32)
    w_c = jax.random.uniform(k5, (embed_dim, v3_), jnp.float32, -bound, bound)
    b_c = jax.random.uniform(k6, (v3_,), jnp.float32, -bound, bound)

    out_c = vocab_logits(x_c, w_c, b_c, tile_cols=128, streaming=True)
    jax.block_until_ready(out_c)
    ref_c = jax.nn.log_softmax(x_c @ w_c + b_c, axis=-1)
    assert out_c.shape == (batch, seq, v3_)
    assert jnp.allclose(out_c, ref_c, atol=3e-2, rtol=3e-2), "mismatch (streaming)"

    print("KERNEL_OK")
</pallas_src>

<mosaic_0001>
module attributes {stable_mosaic.version = 11 : i64} {
  func.func @_vl_resident_kernel(%arg0: i32, %arg1: i32, %arg2: memref<128x128xf32, #tpu.memory_space<vmem>>, %arg3: memref<128x128xbf16, #tpu.memory_space<vmem>>, %arg4: memref<1x128xf32, #tpu.memory_space<vmem>>, %arg5: memref<128x128xf32, #tpu.memory_space<vmem>>, %arg6: memref<128x1xf32, #tpu.memory_space<vmem>>, %arg7: memref<128x1xf32, #tpu.memory_space<vmem>>) attributes {dimension_semantics = [#tpu.dimension_semantics<parallel>, #tpu.dimension_semantics<arbitrary>], iteration_bounds = array<i64: 1, 1>, scalar_prefetch = 0 : i64, scratch_operands = 2 : i64, tpu.core_type = #tpu.core_type<tc>, window_params = [{transform_indices = @transform_0, window_bounds = array<i64: 128, 128>}, {transform_indices = @transform_1, window_bounds = array<i64: 128, 128>}, {transform_indices = @transform_2, window_bounds = array<i64: 1, 128>}, {transform_indices = @transform_3, window_bounds = array<i64: 128, 128>}]} {
    %c0_i32 = arith.constant 0 : i32
    %0 = arith.cmpi eq, %arg1, %c0_i32 : i32
    %1 = arith.extui %0 : i1 to i32
    %c0_i32_0 = arith.constant 0 : i32
    %2 = arith.cmpi ne, %1, %c0_i32_0 : i32
    scf.if %2 {
      %cst_19 = arith.constant 0xFF800000 : f32
      %33 = vector.broadcast %cst_19 : f32 to vector<128x1xf32>
      %c0_20 = arith.constant 0 : index
      %c0_21 = arith.constant 0 : index
      %34 = vector.load %arg6[%c0_20, %c0_21] : memref<128x1xf32, #tpu.memory_space<vmem>>, vector<128x1xf32>
      tpu.vector_store %arg6[%c0_20, %c0_21], %33 {strides = array<i32>} : memref<128x1xf32, #tpu.memory_space<vmem>>, vector<128x1xf32>,
      %cst_22 = arith.constant 0.000000e+00 : f32
      %35 = vector.broadcast %cst_22 : f32 to vector<128x1xf32>
      %c0_23 = arith.constant 0 : index
      %c0_24 = arith.constant 0 : index
      %36 = vector.load %arg7[%c0_23, %c0_24] : memref<128x1xf32, #tpu.memory_space<vmem>>, vector<128x1xf32>
      tpu.vector_store %arg7[%c0_23, %c0_24], %35 {strides = array<i32>} : memref<128x1xf32, #tpu.memory_space<vmem>>, vector<128x1xf32>,
    } else {
    }
    %c0 = arith.constant 0 : index
    %c0_1 = arith.constant 0 : index
    %3 = vector.load %arg2[%c0, %c0_1] : memref<128x128xf32, #tpu.memory_space<vmem>>, vector<128x128xf32>
    %4 = arith.truncf %3 : vector<128x128xf32> to vector<128x128xbf16>
    %c0_2 = arith.constant 0 : index
    %c0_3 = arith.constant 0 : index
    %5 = vector.load %arg3[%c0_2, %c0_3] : memref<128x128xbf16, #tpu.memory_space<vmem>>, vector<128x128xbf16>
    %cst = arith.constant dense<0.000000e+00> : vector<128x128xf32>
    %6 = tpu.matmul %4, %5, %cst {dimension_numbers = #tpu.dot_dimension_numbers<[1], [0], [0], [1], [0, 0, 1, 1], [], []>} : vector<128x128xbf16>, vector<128x128xbf16>, vector<128x128xf32> -> vector<128x128xf32>
    %c0_4 = arith.constant 0 : index
    %c0_5 = arith.constant 0 : index
    %7 = vector.load %arg4[%c0_4, %c0_5] : memref<1x128xf32, #tpu.memory_space<vmem>>, vector<1x128xf32>
    %8 = vector.broadcast %7 : vector<1x128xf32> to vector<128x128xf32>
    %9 = arith.addf %6, %8 : vector<128x128xf32>
    %c0_6 = arith.constant 0 : index
    %c0_7 = arith.constant 0 : index
    %10 = vector.load %arg6[%c0_6, %c0_7] : memref<128x1xf32, #tpu.memory_space<vmem>>, vector<128x1xf32>
    %cst_8 = arith.constant dense<0xFF800000> : vector<128xf32>
    %11 = vector.multi_reduction <maximumf>, %9, %cst_8 [1] : vector<128x128xf32> to vector<128xf32>
    %12 = vector.shape_cast %11 : vector<128xf32> to vector<128x1xf32>
    %13 = arith.maximumf %10, %12 : vector<128x1xf32>
    %14 = arith.subf %10, %13 : vector<128x1xf32>
    %15 = math.exp %14 : vector<128x1xf32>
    %c0_9 = arith.constant 0 : index
    %c0_10 = arith.constant 0 : index
    %16 = vector.load %arg7[%c0_9, %c0_10] : memref<128x1xf32, #tpu.memory_space<vmem>>, vector<128x1xf32>
    %17 = arith.mulf %15, %16 : vector<128x1xf32>
    %18 = vector.broadcast %13 : vector<128x1xf32> to vector<128x128xf32>
    %19 = arith.subf %9, %18 : vector<128x128xf32>
    %20 = math.exp %19 : vector<128x128xf32>
    %cst_11 = arith.constant dense<0.000000e+00> : vector<128xf32>
    %21 = vector.multi_reduction <add>, %20, %cst_11 [1] : vector<128x128xf32> to vector<128xf32>
    %22 = vector.shape_cast %21 : vector<128xf32> to vector<128x1xf32>
    %23 = arith.addf %17, %22 : vector<128x1xf32>
    %c0_12 = arith.constant 0 : index
    %c0_13 = arith.constant 0 : index
    %24 = vector.load %arg7[%c0_12, %c0_13] : memref<128x1xf32, #tpu.memory_space<vmem>>, vector<128x1xf32>
    tpu.vector_store %arg7[%c0_12, %c0_13], %23 {strides = array<i32>} : memref<128x1xf32, #tpu.memory_space<vmem>>, vector<128x1xf32>,
    %c0_14 = arith.constant 0 : index
    %c0_15 = arith.constant 0 : index
    %25 = vector.load %arg6[%c0_14, %c0_15] : memref<128x1xf32, #tpu.memory_space<vmem>>, vector<128x1xf32>
    tpu.vector_store %arg6[%c0_14, %c0_15], %13 {strides = array<i32>} : memref<128x1xf32, #tpu.memory_space<vmem>>, vector<128x1xf32>,
    %c128_i32 = arith.constant 128 : i32
    %26 = arith.muli %arg1, %c128_i32 : i32
    %27 = tpu.assume_multiple %26, 128 : i32
    %c0_16 = arith.constant 0 : index
    %28 = arith.index_cast %27 : i32 to index
    %29 = vector.load %arg5[%c0_16, %28] : memref<128x128xf32, #tpu.memory_space<vmem>>, vector<128x128xf32>
    tpu.vector_store %arg5[%c0_16, %28], %9 {strides = array<i32>} : memref<128x128xf32, #tpu.memory_space<vmem>>, vector<128x128xf32>,
    %c0_i32_17 = arith.constant 0 : i32
    %30 = arith.cmpi eq, %arg1, %c0_i32_17 : i32
    %31 = arith.extui %30 : i1 to i32
    %c0_i32_18 = arith.constant 0 : i32
    %32 = arith.cmpi ne, %31, %c0_i32_18 : i32
    scf.if %32 {
      %c0_19 = arith.constant 0 : index
      %c0_20 = arith.constant 0 : index
      %33 = vector.load %arg6[%c0_19, %c0_20] : memref<128x1xf32, #tpu.memory_space<vmem>>, vector<128x1xf32>
      %c0_21 = arith.constant 0 : index
      %c0_22 = arith.constant 0 : index
      %34 = vector.load %arg7[%c0_21, %c0_22] : memref<128x1xf32, #tpu.memory_space<vmem>>, vector<128x1xf32>
      %35 = math.log %34 : vector<128x1xf32>
      %36 = arith.addf %33, %35 : vector<128x1xf32>
      %c0_23 = arith.constant 0 : index
      %c0_24 = arith.constant 0 : index
      %37 = vector.load %arg5[%c0_23, %c0_24] : memref<128x128xf32, #tpu.memory_space<vmem>>, vector<128x128xf32>
      %38 = vector.broadcast %36 : vector<128x1xf32> to vector<128x128xf32>
      %39 = arith.subf %37, %38 : vector<128x128xf32>
      %c0_25 = arith.constant 0 : index
      %c0_26 = arith.constant 0 : index
      %40 = vector.load %arg5[%c0_25, %c0_26] : memref<128x128xf32, #tpu.memory_space<vmem>>, vector<128x128xf32>
      tpu.vector_store %arg5[%c0_25, %c0_26], %39 {strides = array<i32>} : memref<128x128xf32, #tpu.memory_space<vmem>>, vector<128x128xf32>,
    } else {
    }
    return
  }
  func.func @transform_0(%arg0: i32, %arg1: i32) -> (i32, i32) {
    %c0_i32 = arith.constant 0 : i32
    %c0_i32_0 = arith.constant 0 : i32
    return %arg0, %c0_i32 : i32, i32
  }
  func.func @transform_1(%arg0: i32, %arg1: i32) -> (i32, i32) {
    %c0_i32 = arith.constant 0 : i32
    %c0_i32_0 = arith.constant 0 : i32
    return %c0_i32, %arg1 : i32, i32
  }
  func.func @transform_2(%arg0: i32, %arg1: i32) -> (i32, i32) {
    %c0_i32 = arith.constant 0 : i32
    %c0_i32_0 = arith.constant 0 : i32
    return %c0_i32, %arg1 : i32, i32
  }
  func.func @transform_3(%arg0: i32, %arg1: i32) -> (i32, i32) {
    %c0_i32 = arith.constant 0 : i32
    %c0_i32_0 = arith.constant 0 : i32
    return %arg0, %c0_i32 : i32, i32
  }
}

</mosaic_0001>

<llo_original>
// kernel: tpu_custom_call.1
$region0: #{tpu_custom_call.1}
  #allocation0 [shape = 'u32[]', space=smem, size = 0x4, offset = 0x4, fixed_abs, tag = 'smem constant byte address 0x4 - core index']
  #allocation1 [shape = 'u32[72,128]{1,0:T(1,128)}', space=vmem, size = 0x9000, scoped, tag = 'internal scratch']
  #allocation2 [shape = 'f32[128,1]{1,0:T(8,128)}', space=vmem, size = 0x10000, scoped, tag = 'scratch operand']
  #allocation3 [shape = 'f32[128,1]{1,0:T(8,128)}', space=vmem, size = 0x10000, scoped, tag = 'scratch operand']
  %s0 = inlined_call_operand.hbm [shape: f32[128,128], index: 0, kind: input, shape index: {}]
  %s1 = inlined_call_operand.hbm [shape: bf16[128,128], index: 1, kind: input, shape index: {}]
  %s2 = inlined_call_operand.vmem [shape: f32[1,128], index: 2, kind: input, shape index: {}]
  %s3 = inlined_call_operand.hbm [shape: f32[128,128], index: 3, kind: output, shape index: {}]
  %s4 = sld [smem:[#allocation0]]
  $region38: #{tpu_custom_call.1} parent=0
    _
  %s6 = ssub.s32 1, %s4
  %s7 = scalar_select 0, %s6, %s4
  $region1: #{tpu_custom_call.1} parent=0
    #allocation4 [shape = 'u8[65536]{0}', space=vmem, size = 0x10000, scoped, tag = 'input window, operand 0, single buffered']
    #allocation5 [shape = 's32[1]{0}', space=sflag, size = 0x4, scoped, tag = 'scoped memory for tpu_custom_call.1']
    #allocation6 [shape = 's32[1]{0}', space=sflag, size = 0x4, scoped, tag = 'scoped memory for tpu_custom_call.1']
    #allocation7 [shape = 'u8[32768]{0}', space=vmem, size = 0x8000, scoped, tag = 'input window, operand 1, single buffered']
    #allocation8 [shape = 's32[1]{0}', space=sflag, size = 0x4, scoped, tag = 'scoped memory for tpu_custom_call.1']
    #allocation9 [shape = 'u8[65536]{0}', space=vmem, size = 0x10000, scoped, tag = 'output window, operand 0, single buffered']
    %8 = vsyncpa [#allocation5], 0
    %9 = vsyncpa [#allocation8], 0
    %10 = vsyncpa [#allocation6], 0
    // Predicated region
    $region2: #{tpu_custom_call.1} parent=1 // pred_check
      _
    $region3: #{tpu_custom_call.1} parent=1 // pred_check_branch
      %12 = sbr.rel (0) target = $region5
    $region4: #{tpu_custom_call.1} parent=1 // pred_region
      %14 = vsyncadd [#allocation5], 0
      %s15 = sshll.u32 %s0, 4
      %s16 = int_to_ptr.hbm [resolvable:$true] %s15
      %s17 = sshll.u32 [#allocation4], 4
      %s18 = int_to_ptr.vmem [resolvable:$true] %s17
      %23 = dma.hbm_to_vmem [thread:$0]  %s16, 2048, %s18, [#allocation5], 128, 128, 8
    $region5: #{tpu_custom_call.1} parent=1 // pred_fallthru
      _
    // Predicated region
    $region6: #{tpu_custom_call.1} parent=1 // pred_check
      _
    $region7: #{tpu_custom_call.1} parent=1 // pred_check_branch
      %25 = sbr.rel (0) target = $region9
    $region8: #{tpu_custom_call.1} parent=1 // pred_region
      %27 = vsyncadd [#allocation8], 0
      %s28 = sshll.u32 %s1, 4
      %s29 = int_to_ptr.hbm [resolvable:$true] %s28
      %s30 = sshll.u32 [#allocation7], 4
      %s31 = int_to_ptr.vmem [resolvable:$true] %s30
      %36 = dma.hbm_to_vmem [thread:$0]  %s29, 1024, %s31, [#allocation8], 64, 64, 4
    $region9: #{tpu_custom_call.1} parent=1 // pred_fallthru
      _
    // Predicated region
    $region10: #{tpu_custom_call.1} parent=1 // pred_check
      _
    $region11: #{tpu_custom_call.1} parent=1 // pred_check_branch
      %38 = sbr.rel (0) target = $region13
    $region12: #{tpu_custom_call.1} parent=1 // pred_region
      _
    $region13: #{tpu_custom_call.1} parent=1 // pred_fallthru
      _
    // Predicated region
    $region14: #{tpu_custom_call.1} parent=1 // pred_check
      _
    $region15: #{tpu_custom_call.1} parent=1 // pred_check_branch
      %40 = sbr.rel (0) target = $region17
    $region16: #{tpu_custom_call.1} parent=1 // pred_region
      %42 = dma.done [#allocation5], 2048
    $region17: #{tpu_custom_call.1} parent=1 // pred_fallthru
      _
    // Predicated region
    $region18: #{tpu_custom_call.1} parent=1 // pred_check
      _
    $region19: #{tpu_custom_call.1} parent=1 // pred_check_branch
      %44 = sbr.rel (0) target = $region21
    $region20: #{tpu_custom_call.1} parent=1 // pred_region
      %46 = dma.done [#allocation8], 1024
    $region21: #{tpu_custom_call.1} parent=1 // pred_fallthru
      _
    %p47 = scmp.eq.s32.totalorder 0, 0
    // Predicated region
    $region22: #{tpu_custom_call.1} parent=1 // pred_check
      %p48 = pneg %p47
    $region23: #{tpu_custom_call.1} parent=1 // pred_check_branch
      %50 = sbr.rel (%p48) target = $region25
    $region24: #{tpu_custom_call.1} parent=1 // pred_region
      %vm51 = vcmask 7168
      %52 = vst.msk [vmem:[#allocation2] sm:$0xff] %vm51, -inf
      %53 = vst.msk [vmem:[#allocation2 + $0x8] sm:$0xff] %vm51, -inf
      %54 = vst.msk [vmem:[#allocation2 + $0x10] sm:$0xff] %vm51, -inf
      %55 = vst.msk [vmem:[#allocation2 + $0x18] sm:$0xff] %vm51, -inf
      %56 = vst.msk [vmem:[#allocation2 + $0x20] sm:$0xff] %vm51, -inf
      %57 = vst.msk [vmem:[#allocation2 + $0x28] sm:$0xff] %vm51, -inf
      %58 = vst.msk [vmem:[#allocation2 + $0x30] sm:$0xff] %vm51, -inf
      %59 = vst.msk [vmem:[#allocation2 + $0x38] sm:$0xff] %vm51, -inf
      %60 = vst.msk [vmem:[#allocation2 + $0x40] sm:$0xff] %vm51, -inf
      %61 = vst.msk [vmem:[#allocation2 + $0x48] sm:$0xff] %vm51, -inf
      %62 = vst.msk [vmem:[#allocation2 + $0x50] sm:$0xff] %vm51, -inf
      %63 = vst.msk [vmem:[#allocation2 + $0x58] sm:$0xff] %vm51, -inf
      %64 = vst.msk [vmem:[#allocation2 + $0x60] sm:$0xff] %vm51, -inf
      %65 = vst.msk [vmem:[#allocation2 + $0x68] sm:$0xff] %vm51, -inf
      %66 = vst.msk [vmem:[#allocation2 + $0x70] sm:$0xff] %vm51, -inf
      %67 = vst.msk [vmem:[#allocation2 + $0x78] sm:$0xff] %vm51, -inf
      %68 = vst.msk [vmem:[#allocation3] sm:$0xff] %vm51, 0.0
      %69 = vst.msk [vmem:[#allocation3 + $0x8] sm:$0xff] %vm51, 0.0
      %70 = vst.msk [vmem:[#allocation3 + $0x10] sm:$0xff] %vm51, 0.0
      %71 = vst.msk [vmem:[#allocation3 + $0x18] sm:$0xff] %vm51, 0.0
      %72 = vst.msk [vmem:[#allocation3 + $0x20] sm:$0xff] %vm51, 0.0
      %73 = vst.msk [vmem:[#allocation3 + $0x28] sm:$0xff] %vm51, 0.0
      %74 = vst.msk [vmem:[#allocation3 + $0x30] sm:$0xff] %vm51, 0.0
      %75 = vst.msk [vmem:[#allocation3 + $0x38] sm:$0xff] %vm51, 0.0
      %76 = vst.msk [vmem:[#allocation3 + $0x40] sm:$0xff] %vm51, 0.0
      %77 = vst.msk [vmem:[#allocation3 + $0x48] sm:$0xff] %vm51, 0.0
      %78 = vst.msk [vmem:[#allocation3 + $0x50] sm:$0xff] %vm51, 0.0
      %79 = vst.msk [vmem:[#allocation3 + $0x58] sm:$0xff] %vm51, 0.0
      %80 = vst.msk [vmem:[#allocation3 + $0x60] sm:$0xff] %vm51, 0.0
      %81 = vst.msk [vmem:[#allocation3 + $0x68] sm:$0xff] %vm51, 0.0
      %82 = vst.msk [vmem:[#allocation3 + $0x70] sm:$0xff] %vm51, 0.0
      %83 = vst.msk [vmem:[#allocation3 + $0x78] sm:$0xff] %vm51, 0.0
    $region25: #{tpu_custom_call.1} parent=1 // pred_fallthru
      _
    %v84 = vld [vmem:[#allocation4] sm:$0xff]
    %v85 = vld [vmem:[#allocation4 + $0x8] sm:$0xff]
    %v86 = vld [vmem:[#allocation4 + $0x10] sm:$0xff]
    %v87 = vld [vmem:[#allocation4 + $0x18] sm:$0xff]
    %v88 = vld [vmem:[#allocation4 + $0x20] sm:$0xff]
    %v89 = vld [vmem:[#allocation4 + $0x28] sm:$0xff]
    %v90 = vld [vmem:[#allocation4 + $0x30] sm:$0xff]
    %v91 = vld [vmem:[#allocation4 + $0x38] sm:$0xff]
    %v92 = vld [vmem:[#allocation4 + $0x40] sm:$0xff]
    %v93 = vld [vmem:[#allocation4 + $0x48] sm:$0xff]
    %v94 = vld [vmem:[#allocation4 + $0x50] sm:$0xff]
    %v95 = vld [vmem:[#allocation4 + $0x58] sm:$0xff]
    %v96 = vld [vmem:[#allocation4 + $0x60] sm:$0xff]
    %v97 = vld [vmem:[#allocation4 + $0x68] sm:$0xff]
    %v98 = vld [vmem:[#allocation4 + $0x70] sm:$0xff]
    %v99 = vld [vmem:[#allocation4 + $0x78] sm:$0xff]
    %v100 = vpack.c.bf16 %v85, %v84
    %v101 = vpack.c.bf16 %v87, %v86
    %v102 = vpack.c.bf16 %v89, %v88
    %v103 = vpack.c.bf16 %v91, %v90
    %v104 = vpack.c.bf16 %v93, %v92
    %v105 = vpack.c.bf16 %v95, %v94
    %v106 = vpack.c.bf16 %v97, %v96
    %v107 = vpack.c.bf16 %v99, %v98
    %v108 = vld [vmem:[#allocation7] sm:$0xf]
    %v109 = vld [vmem:[#allocation7 + $0x4] sm:$0xf]
    %v110 = vld [vmem:[#allocation7 + $0x8] sm:$0xf]
    %v111 = vld [vmem:[#allocation7 + $0xc] sm:$0xf]
    %v112 = vld [vmem:[#allocation7 + $0x10] sm:$0xf]
    %v113 = vld [vmem:[#allocation7 + $0x14] sm:$0xf]
    %v114 = vld [vmem:[#allocation7 + $0x18] sm:$0xf]
    %v115 = vld [vmem:[#allocation7 + $0x1c] sm:$0xf]
    %v116 = vld [vmem:[#allocation7 + $0x20] sm:$0xf]
    %v117 = vld [vmem:[#allocation7 + $0x24] sm:$0xf]
    %v118 = vld [vmem:[#allocation7 + $0x28] sm:$0xf]
    %v119 = vld [vmem:[#allocation7 + $0x2c] sm:$0xf]
    %v120 = vld [vmem:[#allocation7 + $0x30] sm:$0xf]
    %v121 = vld [vmem:[#allocation7 + $0x34] sm:$0xf]
    %v122 = vld [vmem:[#allocation7 + $0x38] sm:$0xf]
    %v123 = vld [vmem:[#allocation7 + $0x3c] sm:$0xf]
    %v124 = vld [vmem:[%s2] sm:$0x1]
    %v126 = vperm.slane %v124, 0
    %v144 = vunpack.c.l.b16 %v108
    %v145 = vunpack.c.l.b16 %v109
    %v146 = vunpack.c.l.b16 %v110
    %v147 = vunpack.c.l.b16 %v111
    %v148 = vunpack.c.l.b16 %v112
    %v149 = vunpack.c.l.b16 %v113
    %v150 = vunpack.c.l.b16 %v114
    %v151 = vunpack.c.l.b16 %v115
    %v152 = vunpack.c.l.b16 %v116
    %v153 = vunpack.c.l.b16 %v117
    %v154 = vunpack.c.l.b16 %v118
    %v155 = vunpack.c.l.b16 %v119
    %v156 = vunpack.c.l.b16 %v120
    %v157 = vunpack.c.l.b16 %v121
    %v158 = vunpack.c.l.b16 %v122
    %v159 = vunpack.c.l.b16 %v123
    %v160 = vpack.c.b16 %v145, %v144
    %v161 = vpack.c.b16 %v147, %v146
    %v162 = vpack.c.b16 %v149, %v148
    %v163 = vpack.c.b16 %v151, %v150
    %v164 = vpack.c.b16 %v153, %v152
    %v165 = vpack.c.b16 %v155, %v154
    %v166 = vpack.c.b16 %v157, %v156
    %v167 = vpack.c.b16 %v159, %v158
    %176 = vmatpush.bf16.msra.mxu0 %v167
    %177 = vmatpush.bf16.msra.mxu0 %v166
    %178 = vmatpush.bf16.msra.mxu0 %v165
    %179 = vmatpush.bf16.msra.mxu0 %v164
    %180 = vmatpush.bf16.msra.mxu0 %v163
    %181 = vmatpush.bf16.msra.mxu0 %v162
    %182 = vmatpush.bf16.msra.mxu0 %v161
    %183 = vmatpush.bf16.msra.mxu0 %v160
    %184 = vmatmul.bf16.gmra.mxu0 %v100
    %v185 = vpop.f32.mrf.mxu0
    %v186 = vadd.f32 %v126, %v185
    %v187 = vpop.f32.mrf.mxu0
    %v188 = vadd.f32 %v126, %v187
    %189 = vmatmul.bf16.gmra.mxu0 %v101
    %v190 = vpop.f32.mrf.mxu0
    %v191 = vadd.f32 %v126, %v190
    %v192 = vpop.f32.mrf.mxu0
    %v193 = vadd.f32 %v126, %v192
    %194 = vmatmul.bf16.gmra.mxu0 %v102
    %v195 = vpop.f32.mrf.mxu0
    %v196 = vadd.f32 %v126, %v195
    %v197 = vpop.f32.mrf.mxu0
    %v198 = vadd.f32 %v126, %v197
    %199 = vmatmul.bf16.gmra.mxu0 %v103
    %v200 = vpop.f32.mrf.mxu0
    %v201 = vadd.f32 %v126, %v200
    %v202 = vpop.f32.mrf.mxu0
    %v203 = vadd.f32 %v126, %v202
    %204 = vmatmul.bf16.gmra.mxu0 %v104
    %v205 = vpop.f32.mrf.mxu0
    %v206 = vadd.f32 %v126, %v205
    %v207 = vpop.f32.mrf.mxu0
    %v208 = vadd.f32 %v126, %v207
    %209 = vmatmul.bf16.gmra.mxu0 %v105
    %v210 = vpop.f32.mrf.mxu0
    %v211 = vadd.f32 %v126, %v210
    %v212 = vpop.f32.mrf.mxu0
    %v213 = vadd.f32 %v126, %v212
    %214 = vmatmul.bf16.gmra.mxu0 %v106
    %v215 = vpop.f32.mrf.mxu0
    %v216 = vadd.f32 %v126, %v215
    %v217 = vpop.f32.mrf.mxu0
    %v218 = vadd.f32 %v126, %v217
    %219 = vmatmul.bf16.gmra.mxu0 %v107
    %v220 = vpop.f32.mrf.mxu0
    %v221 = vadd.f32 %v126, %v220
    %v222 = vpop.f32.mrf.mxu0
    %v223 = vadd.f32 %v126, %v222
    %224 = vdwg.mxu0
    %v225 = vld [vmem:[#allocation2] sm:$0xff]
    %v226 = vld [vmem:[#allocation2 + $0x8] sm:$0xff]
    %v227 = vld [vmem:[#allocation2 + $0x10] sm:$0xff]
    %v228 = vld [vmem:[#allocation2 + $0x18] sm:$0xff]
    %v229 = vld [vmem:[#allocation2 + $0x20] sm:$0xff]
    %v230 = vld [vmem:[#allocation2 + $0x28] sm:$0xff]
    %v231 = vld [vmem:[#allocation2 + $0x30] sm:$0xff]
    %v232 = vld [vmem:[#allocation2 + $0x38] sm:$0xff]
    %v233 = vld [vmem:[#allocation2 + $0x40] sm:$0xff]
    %v234 = vld [vmem:[#allocation2 + $0x48] sm:$0xff]
    %v235 = vld [vmem:[#allocation2 + $0x50] sm:$0xff]
    %v236 = vld [vmem:[#allocation2 + $0x58] sm:$0xff]
    %v237 = vld [vmem:[#allocation2 + $0x60] sm:$0xff]
    %v238 = vld [vmem:[#allocation2 + $0x68] sm:$0xff]
    %v239 = vld [vmem:[#allocation2 + $0x70] sm:$0xff]
    %v240 = vld [vmem:[#allocation2 + $0x78] sm:$0xff]
    %241 = vmax.xlane.f32.xlu0 %v186
    %v242 = vpop.xlane.xlu0 %241
    %243 = vmax.xlane.f32.xlu0 %v188
    %v244 = vpop.xlane.xlu0 %243
    %245 = vmax.xlane.f32.xlu0 %v191
    %v246 = vpop.xlane.xlu0 %245
    %247 = vmax.xlane.f32.xlu0 %v193
    %v248 = vpop.xlane.xlu0 %247
    %249 = vmax.xlane.f32.xlu0 %v196
    %v250 = vpop.xlane.xlu0 %249
    %251 = vmax.xlane.f32.xlu0 %v198
    %v252 = vpop.xlane.xlu0 %251
    %253 = vmax.xlane.f32.xlu0 %v201
    %v254 = vpop.xlane.xlu0 %253
    %255 = vmax.xlane.f32.xlu0 %v203
    %v256 = vpop.xlane.xlu0 %255
    %257 = vmax.xlane.f32.xlu0 %v206
    %v258 = vpop.xlane.xlu0 %257
    %259 = vmax.xlane.f32.xlu0 %v208
    %v260 = vpop.xlane.xlu0 %259
    %261 = vmax.xlane.f32.xlu0 %v211
    %v262 = vpop.xlane.xlu0 %261
    %263 = vmax.xlane.f32.xlu0 %v213
    %v264 = vpop.xlane.xlu0 %263
    %265 = vmax.xlane.f32.xlu0 %v216
    %v266 = vpop.xlane.xlu0 %265
    %267 = vmax.xlane.f32.xlu0 %v218
    %v268 = vpop.xlane.xlu0 %267
    %269 = vmax.xlane.f32.xlu0 %v221
    %v270 = vpop.xlane.xlu0 %269
    %271 = vmax.xlane.f32.xlu0 %v223
    %v272 = vpop.xlane.xlu0 %271
    %v273 = vmax.f32 %v225, %v242
    %v274 = vmax.f32 %v226, %v244
    %v275 = vmax.f32 %v227, %v246
    %v276 = vmax.f32 %v228, %v248
    %v277 = vmax.f32 %v229, %v250
    %v278 = vmax.f32 %v230, %v252
    %v279 = vmax.f32 %v231, %v254
    %v280 = vmax.f32 %v232, %v256
    %v281 = vmax.f32 %v233, %v258
    %v282 = vmax.f32 %v234, %v260
    %v283 = vmax.f32 %v235, %v262
    %v284 = vmax.f32 %v236, %v264
    %v285 = vmax.f32 %v237, %v266
    %v286 = vmax.f32 %v238, %v268
    %v287 = vmax.f32 %v239, %v270
    %v288 = vmax.f32 %v240, %v272
    %v289 = vsub.f32 %v225, %v273
    %v290 = vsub.f32 %v226, %v274
    %v291 = vsub.f32 %v227, %v275
    %v292 = vsub.f32 %v228, %v276
    %v293 = vsub.f32 %v229, %v277
    %v294 = vsub.f32 %v230, %v278
    %v295 = vsub.f32 %v231, %v279
    %v296 = vsub.f32 %v232, %v280
    %v297 = vsub.f32 %v233, %v281
    %v298 = vsub.f32 %v234, %v282
    %v299 = vsub.f32 %v235, %v283
    %v300 = vsub.f32 %v236, %v284
    %v301 = vsub.f32 %v237, %v285
    %v302 = vsub.f32 %v238, %v286
    %v303 = vsub.f32 %v239, %v287
    %v304 = vsub.f32 %v240, %v288
    %v305 = vmul.f32 %v289, 1.442695
    %v306 = vpow.pop %v305
    %v307 = vmul.f32 %v290, 1.442695
    %v308 = vpow.pop %v307
    %v309 = vmul.f32 %v291, 1.442695
    %v310 = vpow.pop %v309
    %v311 = vmul.f32 %v292, 1.442695
    %v312 = vpow.pop %v311
    %v313 = vmul.f32 %v293, 1.442695
    %v314 = vpow.pop %v313
    %v315 = vmul.f32 %v294, 1.442695
    %v316 = vpow.pop %v315
    %v317 = vmul.f32 %v295, 1.442695
    %v318 = vpow.pop %v317
    %v319 = vmul.f32 %v296, 1.442695
    %v320 = vpow.pop %v319
    %v321 = vmul.f32 %v297, 1.442695
    %v322 = vpow.pop %v321
    %v323 = vmul.f32 %v298, 1.442695
    %v324 = vpow.pop %v323
    %v325 = vmul.f32 %v299, 1.442695
    %v326 = vpow.pop %v325
    %v327 = vmul.f32 %v300, 1.442695
    %v328 = vpow.pop %v327
    %v329 = vmul.f32 %v301, 1.442695
    %v330 = vpow.pop %v329
    %v331 = vmul.f32 %v302, 1.442695
    %v332 = vpow.pop %v331
    %v333 = vmul.f32 %v303, 1.442695
    %v334 = vpow.pop %v333
    %v335 = vmul.f32 %v304, 1.442695
    %v336 = vpow.pop %v335
    %v337 = vld [vmem:[#allocation3] sm:$0xff]
    %v338 = vld [vmem:[#allocation3 + $0x8] sm:$0xff]
    %v339 = vld [vmem:[#allocation3 + $0x10] sm:$0xff]
    %v340 = vld [vmem:[#allocation3 + $0x18] sm:$0xff]
    %v341 = vld [vmem:[#allocation3 + $0x20] sm:$0xff]
    %v342 = vld [vmem:[#allocation3 + $0x28] sm:$0xff]
    %v343 = vld [vmem:[#allocation3 + $0x30] sm:$0xff]
    %v344 = vld [vmem:[#allocation3 + $0x38] sm:$0xff]
    %v345 = vld [vmem:[#allocation3 + $0x40] sm:$0xff]
    %v346 = vld [vmem:[#allocation3 + $0x48] sm:$0xff]
    %v347 = vld [vmem:[#allocation3 + $0x50] sm:$0xff]
    %v348 = vld [vmem:[#allocation3 + $0x58] sm:$0xff]
    %v349 = vld [vmem:[#allocation3 + $0x60] sm:$0xff]
    %v350 = vld [vmem:[#allocation3 + $0x68] sm:$0xff]
    %v351 = vld [vmem:[#allocation3 + $0x70] sm:$0xff]
    %v352 = vld [vmem:[#allocation3 + $0x78] sm:$0xff]
    %v353 = vmul.f32 %v306, %v337
    %v354 = vmul.f32 %v308, %v338
    %v355 = vmul.f32 %v310, %v339
    %v356 = vmul.f32 %v312, %v340
    %v357 = vmul.f32 %v314, %v341
    %v358 = vmul.f32 %v316, %v342
    %v359 = vmul.f32 %v318, %v343
    %v360 = vmul.f32 %v320, %v344
    %v361 = vmul.f32 %v322, %v345
    %v362 = vmul.f32 %v324, %v346
    %v363 = vmul.f32 %v326, %v347
    %v364 = vmul.f32 %v328, %v348
    %v365 = vmul.f32 %v330, %v349
    %v366 = vmul.f32 %v332, %v350
    %v367 = vmul.f32 %v334, %v351
    %v368 = vmul.f32 %v336, %v352
    %370 = vset.pattern.permute.xlu0 0
    %371 = vperm.xlu0 %370, %v273
    %v372 = vpop.permute.xlu0 %371
    %375 = vset.pattern.permute.xlu0 0
    %376 = vperm.xlu0 %375, %v274
    %v377 = vpop.permute.xlu0 %376
    %380 = vset.pattern.permute.xlu0 0
    %381 = vperm.xlu0 %380, %v275
    %v382 = vpop.permute.xlu0 %381
    %385 = vset.pattern.permute.xlu0 0
    %386 = vperm.xlu0 %385, %v276
    %v387 = vpop.permute.xlu0 %386
    %390 = vset.pattern.permute.xlu0 0
    %391 = vperm.xlu0 %390, %v277
    %v392 = vpop.permute.xlu0 %391
    %395 = vset.pattern.permute.xlu0 0
    %396 = vperm.xlu0 %395, %v278
    %v397 = vpop.permute.xlu0 %396
    %400 = vset.pattern.permute.xlu0 0
    %401 = vperm.xlu0 %400, %v279
    %v402 = vpop.permute.xlu0 %401
    %405 = vset.pattern.permute.xlu0 0
    %406 = vperm.xlu0 %405, %v280
    %v407 = vpop.permute.xlu0 %406
    %410 = vset.pattern.permute.xlu0 0
    %411 = vperm.xlu0 %410, %v281
    %v412 = vpop.permute.xlu0 %411
    %415 = vset.pattern.permute.xlu0 0
    %416 = vperm.xlu0 %415, %v282
    %v417 = vpop.permute.xlu0 %416
    %420 = vset.pattern.permute.xlu0 0
    %421 = vperm.xlu0 %420, %v283
    %v422 = vpop.permute.xlu0 %421
    %425 = vset.pattern.permute.xlu0 0
    %426 = vperm.xlu0 %425, %v284
    %v427 = vpop.permute.xlu0 %426
    %430 = vset.pattern.permute.xlu0 0
    %431 = vperm.xlu0 %430, %v285
    %v432 = vpop.permute.xlu0 %431
    %435 = vset.pattern.permute.xlu0 0
    %436 = vperm.xlu0 %435, %v286
    %v437 = vpop.permute.xlu0 %436
    %440 = vset.pattern.permute.xlu0 0
    %441 = vperm.xlu0 %440, %v287
    %v442 = vpop.permute.xlu0 %441
    %445 = vset.pattern.permute.xlu0 0
    %446 = vperm.xlu0 %445, %v288
    %v447 = vpop.permute.xlu0 %446
    %v449 = vsub.f32 %v186, %v372
    %v450 = vsub.f32 %v188, %v377
    %v451 = vsub.f32 %v191, %v382
    %v452 = vsub.f32 %v193, %v387
    %v453 = vsub.f32 %v196, %v392
    %v454 = vsub.f32 %v198, %v397
    %v455 = vsub.f32 %v201, %v402
    %v456 = vsub.f32 %v203, %v407
    %v457 = vsub.f32 %v206, %v412
    %v458 = vsub.f32 %v208, %v417
    %v459 = vsub.f32 %v211, %v422
    %v460 = vsub.f32 %v213, %v427
    %v461 = vsub.f32 %v216, %v432
    %v462 = vsub.f32 %v218, %v437
    %v463 = vsub.f32 %v221, %v442
    %v464 = vsub.f32 %v223, %v447
    %v465 = vmul.f32 %v449, 1.442695
    %v466 = vpow.pop %v465
    %v467 = vmul.f32 %v450, 1.442695
    %v468 = vpow.pop %v467
    %v469 = vmul.f32 %v451, 1.442695
    %v470 = vpow.pop %v469
    %v471 = vmul.f32 %v452, 1.442695
    %v472 = vpow.pop %v471
    %v473 = vmul.f32 %v453, 1.442695
    %v474 = vpow.pop %v473
    %v475 = vmul.f32 %v454, 1.442695
    %v476 = vpow.pop %v475
    %v477 = vmul.f32 %v455, 1.442695
    %v478 = vpow.pop %v477
    %v479 = vmul.f32 %v456, 1.442695
    %v480 = vpow.pop %v479
    %v481 = vmul.f32 %v457, 1.442695
    %v482 = vpow.pop %v481
    %v483 = vmul.f32 %v458, 1.442695
    %v484 = vpow.pop %v483
    %v485 = vmul.f32 %v459, 1.442695
    %v486 = vpow.pop %v485
    %v487 = vmul.f32 %v460, 1.442695
    %v488 = vpow.pop %v487
    %v489 = vmul.f32 %v461, 1.442695
    %v490 = vpow.pop %v489
    %v491 = vmul.f32 %v462, 1.442695
    %v492 = vpow.pop %v491
    %v493 = vmul.f32 %v463, 1.442695
    %v494 = vpow.pop %v493
    %v495 = vmul.f32 %v464, 1.442695
    %v496 = vpow.pop %v495
    %497 = vadd.xlane.f32.xlu0 %v466
    %v498 = vpop.xlane.xlu0 %497
    %499 = vadd.xlane.f32.xlu0 %v468
    %v500 = vpop.xlane.xlu0 %499
    %501 = vadd.xlane.f32.xlu0 %v470
    %v502 = vpop.xlane.xlu0 %501
    %503 = vadd.xlane.f32.xlu0 %v472
    %v504 = vpop.xlane.xlu0 %503
    %505 = vadd.xlane.f32.xlu0 %v474
    %v506 = vpop.xlane.xlu0 %505
    %507 = vadd.xlane.f32.xlu0 %v476
    %v508 = vpop.xlane.xlu0 %507
    %509 = vadd.xlane.f32.xlu0 %v478
    %v510 = vpop.xlane.xlu0 %509
    %511 = vadd.xlane.f32.xlu0 %v480
    %v512 = vpop.xlane.xlu0 %511
    %513 = vadd.xlane.f32.xlu0 %v482
    %v514 = vpop.xlane.xlu0 %513
    %515 = vadd.xlane.f32.xlu0 %v484
    %v516 = vpop.xlane.xlu0 %515
    %517 = vadd.xlane.f32.xlu0 %v486
    %v518 = vpop.xlane.xlu0 %517
    %519 = vadd.xlane.f32.xlu0 %v488
    %v520 = vpop.xlane.xlu0 %519
    %521 = vadd.xlane.f32.xlu0 %v490
    %v522 = vpop.xlane.xlu0 %521
    %523 = vadd.xlane.f32.xlu0 %v492
    %v524 = vpop.xlane.xlu0 %523
    %525 = vadd.xlane.f32.xlu0 %v494
    %v526 = vpop.xlane.xlu0 %525
    %527 = vadd.xlane.f32.xlu0 %v496
    %v528 = vpop.xlane.xlu0 %527
    %v529 = vadd.f32 %v353, %v498
    %v530 = vadd.f32 %v354, %v500
    %v531 = vadd.f32 %v355, %v502
    %v532 = vadd.f32 %v356, %v504
    %v533 = vadd.f32 %v357, %v506
    %v534 = vadd.f32 %v358, %v508
    %v535 = vadd.f32 %v359, %v510
    %v536 = vadd.f32 %v360, %v512
    %v537 = vadd.f32 %v361, %v514
    %v538 = vadd.f32 %v362, %v516
    %v539 = vadd.f32 %v363, %v518
    %v540 = vadd.f32 %v364, %v520
    %v541 = vadd.f32 %v365, %v522
    %v542 = vadd.f32 %v366, %v524
    %v543 = vadd.f32 %v367, %v526
    %v544 = vadd.f32 %v368, %v528
    %vm545 = vcmask 7168
    %546 = vst.msk [vmem:[#allocation3] sm:$0xff] %vm545, %v529
    %547 = vst.msk [vmem:[#allocation3 + $0x8] sm:$0xff] %vm545, %v530
    %548 = vst.msk [vmem:[#allocation3 + $0x10] sm:$0xff] %vm545, %v531
    %549 = vst.msk [vmem:[#allocation3 + $0x18] sm:$0xff] %vm545, %v532
    %550 = vst.msk [vmem:[#allocation3 + $0x20] sm:$0xff] %vm545, %v533
    %551 = vst.msk [vmem:[#allocation3 + $0x28] sm:$0xff] %vm545, %v534
    %552 = vst.msk [vmem:[#allocation3 + $0x30] sm:$0xff] %vm545, %v535
    %553 = vst.msk [vmem:[#allocation3 + $0x38] sm:$0xff] %vm545, %v536
    %554 = vst.msk [vmem:[#allocation3 + $0x40] sm:$0xff] %vm545, %v537
    %555 = vst.msk [vmem:[#allocation3 + $0x48] sm:$0xff] %vm545, %v538
    %556 = vst.msk [vmem:[#allocation3 + $0x50] sm:$0xff] %vm545, %v539
    %557 = vst.msk [vmem:[#allocation3 + $0x58] sm:$0xff] %vm545, %v540
    %558 = vst.msk [vmem:[#allocation3 + $0x60] sm:$0xff] %vm545, %v541
    %559 = vst.msk [vmem:[#allocation3 + $0x68] sm:$0xff] %vm545, %v542
    %560 = vst.msk [vmem:[#allocation3 + $0x70] sm:$0xff] %vm545, %v543
    %561 = vst.msk [vmem:[#allocation3 + $0x78] sm:$0xff] %vm545, %v544
    %562 = vst.msk [vmem:[#allocation2] sm:$0xff] %vm545, %v273
    %563 = vst.msk [vmem:[#allocation2 + $0x8] sm:$0xff] %vm545, %v274
    %564 = vst.msk [vmem:[#allocation2 + $0x10] sm:$0xff] %vm545, %v275
    %565 = vst.msk [vmem:[#allocation2 + $0x18] sm:$0xff] %vm545, %v276
    %566 = vst.msk [vmem:[#allocation2 + $0x20] sm:$0xff] %vm545, %v277
    %567 = vst.msk [vmem:[#allocation2 + $0x28] sm:$0xff] %vm545, %v278
    %568 = vst.msk [vmem:[#allocation2 + $0x30] sm:$0xff] %vm545, %v279
    %569 = vst.msk [vmem:[#allocation2 + $0x38] sm:$0xff] %vm545, %v280
    %570 = vst.msk [vmem:[#allocation2 + $0x40] sm:$0xff] %vm545, %v281
    %571 = vst.msk [vmem:[#allocation2 + $0x48] sm:$0xff] %vm545, %v282
    %572 = vst.msk [vmem:[#allocation2 + $0x50] sm:$0xff] %vm545, %v283
    %573 = vst.msk [vmem:[#allocation2 + $0x58] sm:$0xff] %vm545, %v284
    %574 = vst.msk [vmem:[#allocation2 + $0x60] sm:$0xff] %vm545, %v285
    %575 = vst.msk [vmem:[#allocation2 + $0x68] sm:$0xff] %vm545, %v286
    %576 = vst.msk [vmem:[#allocation2 + $0x70] sm:$0xff] %vm545, %v287
    %577 = vst.msk [vmem:[#allocation2 + $0x78] sm:$0xff] %vm545, %v288
    %s578 = smul.u32 0, 128
    %s579 = sshra.s32 %s578, 7
    %s580 = sand.u32 %s578, 127
    %s581 = scalar_lea.vmem [#allocation9], %s579
    %582 = vst [vmem:[%s581] sm:$0xff] %v186
    %583 = vst [vmem:[%s581 + $0x8] sm:$0xff] %v188
    %584 = vst [vmem:[%s581 + $0x10] sm:$0xff] %v191
    %585 = vst [vmem:[%s581 + $0x18] sm:$0xff] %v193
    %586 = vst [vmem:[%s581 + $0x20] sm:$0xff] %v196
    %587 = vst [vmem:[%s581 + $0x28] sm:$0xff] %v198
    %588 = vst [vmem:[%s581 + $0x30] sm:$0xff] %v201
    %589 = vst [vmem:[%s581 + $0x38] sm:$0xff] %v203
    %590 = vst [vmem:[%s581 + $0x40] sm:$0xff] %v206
    %591 = vst [vmem:[%s581 + $0x48] sm:$0xff] %v208
    %592 = vst [vmem:[%s581 + $0x50] sm:$0xff] %v211
    %593 = vst [vmem:[%s581 + $0x58] sm:$0xff] %v213
    %594 = vst [vmem:[%s581 + $0x60] sm:$0xff] %v216
    %595 = vst [vmem:[%s581 + $0x68] sm:$0xff] %v218
    %596 = vst [vmem:[%s581 + $0x70] sm:$0xff] %v221
    %597 = vst [vmem:[%s581 + $0x78] sm:$0xff] %v223
    // Predicated region
    $region26: #{tpu_custom_call.1} parent=1 // pred_check
      %p598 = pneg %p47
    $region27: #{tpu_custom_call.1} parent=1 // pred_check_branch
      %600 = sbr.rel (%p598) target = $region29
    $region28: #{tpu_custom_call.1} parent=1 // pred_region
      %v601 = vld [vmem:[#allocation2] sm:$0xff]
      %v602 = vld [vmem:[#allocation2 + $0x8] sm:$0xff]
      %v603 = vld [vmem:[#allocation2 + $0x10] sm:$0xff]
      %v604 = vld [vmem:[#allocation2 + $0x18] sm:$0xff]
      %v605 = vld [vmem:[#allocation2 + $0x20] sm:$0xff]
      %v606 = vld [vmem:[#allocation2 + $0x28] sm:$0xff]
      %v607 = vld [vmem:[#allocation2 + $0x30] sm:$0xff]
      %v608 = vld [vmem:[#allocation2 + $0x38] sm:$0xff]
      %v609 = vld [vmem:[#allocation2 + $0x40] sm:$0xff]
      %v610 = vld [vmem:[#allocation2 + $0x48] sm:$0xff]
      %v611 = vld [vmem:[#allocation2 + $0x50] sm:$0xff]
      %v612 = vld [vmem:[#allocation2 + $0x58] sm:$0xff]
      %v613 = vld [vmem:[#allocation2 + $0x60] sm:$0xff]
      %v614 = vld [vmem:[#allocation2 + $0x68] sm:$0xff]
      %v615 = vld [vmem:[#allocation2 + $0x70] sm:$0xff]
      %v616 = vld [vmem:[#allocation2 + $0x78] sm:$0xff]
      %v617 = vld [vmem:[#allocation3] sm:$0xff]
      %v618 = vld [vmem:[#allocation3 + $0x8] sm:$0xff]
      %v619 = vld [vmem:[#allocation3 + $0x10] sm:$0xff]
      %v620 = vld [vmem:[#allocation3 + $0x18] sm:$0xff]
      %v621 = vld [vmem:[#allocation3 + $0x20] sm:$0xff]
      %v622 = vld [vmem:[#allocation3 + $0x28] sm:$0xff]
      %v623 = vld [vmem:[#allocation3 + $0x30] sm:$0xff]
      %v624 = vld [vmem:[#allocation3 + $0x38] sm:$0xff]
      %v625 = vld [vmem:[#allocation3 + $0x40] sm:$0xff]
      %v626 = vld [vmem:[#allocation3 + $0x48] sm:$0xff]
      %v627 = vld [vmem:[#allocation3 + $0x50] sm:$0xff]
      %v628 = vld [vmem:[#allocation3 + $0x58] sm:$0xff]
      %v629 = vld [vmem:[#allocation3 + $0x60] sm:$0xff]
      %v630 = vld [vmem:[#allocation3 + $0x68] sm:$0xff]
      %v631 = vld [vmem:[#allocation3 + $0x70] sm:$0xff]
      %v632 = vld [vmem:[#allocation3 + $0x78] sm:$0xff]
      %v633 = vlog2.pop %v617
      %v634 = vmul.f32 %v633, 0.6931472
      %v635 = vlog2.pop %v618
      %v636 = vmul.f32 %v635, 0.6931472
      %v637 = vlog2.pop %v619
      %v638 = vmul.f32 %v637, 0.6931472
      %v639 = vlog2.pop %v620
      %v640 = vmul.f32 %v639, 0.6931472
      %v641 = vlog2.pop %v621
      %v642 = vmul.f32 %v641, 0.6931472
      %v643 = vlog2.pop %v622
      %v644 = vmul.f32 %v643, 0.6931472
      %v645 = vlog2.pop %v623
      %v646 = vmul.f32 %v645, 0.6931472
      %v647 = vlog2.pop %v624
      %v648 = vmul.f32 %v647, 0.6931472
      %v649 = vlog2.pop %v625
      %v650 = vmul.f32 %v649, 0.6931472
      %v651 = vlog2.pop %v626
      %v652 = vmul.f32 %v651, 0.6931472
      %v653 = vlog2.pop %v627
      %v654 = vmul.f32 %v653, 0.6931472
      %v655 = vlog2.pop %v628
      %v656 = vmul.f32 %v655, 0.6931472
      %v657 = vlog2.pop %v629
      %v658 = vmul.f32 %v657, 0.6931472
      %v659 = vlog2.pop %v630
      %v660 = vmul.f32 %v659, 0.6931472
      %v661 = vlog2.pop %v631
      %v662 = vmul.f32 %v661, 0.6931472
      %v663 = vlog2.pop %v632
      %v664 = vmul.f32 %v663, 0.6931472
      %v665 = vadd.f32 %v601, %v634
      %v666 = vadd.f32 %v602, %v636
      %v667 = vadd.f32 %v603, %v638
      %v668 = vadd.f32 %v604, %v640
      %v669 = vadd.f32 %v605, %v642
      %v670 = vadd.f32 %v606, %v644
      %v671 = vadd.f32 %v607, %v646
      %v672 = vadd.f32 %v608, %v648
      %v673 = vadd.f32 %v609, %v650
      %v674 = vadd.f32 %v610, %v652
      %v675 = vadd.f32 %v611, %v654
      %v676 = vadd.f32 %v612, %v656
      %v677 = vadd.f32 %v613, %v658
      %v678 = vadd.f32 %v614, %v660
      %v679 = vadd.f32 %v615, %v662
      %v680 = vadd.f32 %v616, %v664
      %v681 = vld [vmem:[#allocation9] sm:$0xff]
      %v682 = vld [vmem:[#allocation9 + $0x8] sm:$0xff]
      %v683 = vld [vmem:[#allocation9 + $0x10] sm:$0xff]
      %v684 = vld [vmem:[#allocation9 + $0x18] sm:$0xff]
      %v685 = vld [vmem:[#allocation9 + $0x20] sm:$0xff]
      %v686 = vld [vmem:[#allocation9 + $0x28] sm:$0xff]
      %v687 = vld [vmem:[#allocation9 + $0x30] sm:$0xff]
      %v688 = vld [vmem:[#allocation9 + $0x38] sm:$0xff]
      %v689 = vld [vmem:[#allocation9 + $0x40] sm:$0xff]
      %v690 = vld [vmem:[#allocation9 + $0x48] sm:$0xff]
      %v691 = vld [vmem:[#allocation9 + $0x50] sm:$0xff]
      %v692 = vld [vmem:[#allocation9 + $0x58] sm:$0xff]
      %v693 = vld [vmem:[#allocation9 + $0x60] sm:$0xff]
      %v694 = vld [vmem:[#allocation9 + $0x68] sm:$0xff]
      %v695 = vld [vmem:[#allocation9 + $0x70] sm:$0xff]
      %v696 = vld [vmem:[#allocation9 + $0x78] sm:$0xff]
      %698 = vset.pattern.permute.xlu0 0
      %699 = vperm.xlu0 %698, %v665
      %v700 = vpop.permute.xlu0 %699
      %703 = vset.pattern.permute.xlu0 0
      %704 = vperm.xlu0 %703, %v666
      %v705 = vpop.permute.xlu0 %704
      %708 = vset.pattern.permute.xlu0 0
      %709 = vperm.xlu0 %708, %v667
      %v710 = vpop.permute.xlu0 %709
      %713 = vset.pattern.permute.xlu0 0
      %714 = vperm.xlu0 %713, %v668
      %v715 = vpop.permute.xlu0 %714
      %718 = vset.pattern.permute.xlu0 0
      %719 = vperm.xlu0 %718, %v669
      %v720 = vpop.permute.xlu0 %719
      %723 = vset.pattern.permute.xlu0 0
      %724 = vperm.xlu0 %723, %v670
      %v725 = vpop.permute.xlu0 %724
      %728 = vset.pattern.permute.xlu0 0
      %729 = vperm.xlu0 %728, %v671
      %v730 = vpop.permute.xlu0 %729
      %733 = vset.pattern.permute.xlu0 0
      %734 = vperm.xlu0 %733, %v672
      %v735 = vpop.permute.xlu0 %734
      %738 = vset.pattern.permute.xlu0 0
      %739 = vperm.xlu0 %738, %v673
      %v740 = vpop.permute.xlu0 %739
      %743 = vset.pattern.permute.xlu0 0
      %744 = vperm.xlu0 %743, %v674
      %v745 = vpop.permute.xlu0 %744
      %748 = vset.pattern.permute.xlu0 0
      %749 = vperm.xlu0 %748, %v675
      %v750 = vpop.permute.xlu0 %749
      %753 = vset.pattern.permute.xlu0 0
      %754 = vperm.xlu0 %753, %v676
      %v755 = vpop.permute.xlu0 %754
      %758 = vset.pattern.permute.xlu0 0
      %759 = vperm.xlu0 %758, %v677
      %v760 = vpop.permute.xlu0 %759
      %763 = vset.pattern.permute.xlu0 0
      %764 = vperm.xlu0 %763, %v678
      %v765 = vpop.permute.xlu0 %764
      %768 = vset.pattern.permute.xlu0 0
      %769 = vperm.xlu0 %768, %v679
      %v770 = vpop.permute.xlu0 %769
      %773 = vset.pattern.permute.xlu0 0
      %774 = vperm.xlu0 %773, %v680
      %v775 = vpop.permute.xlu0 %774
      %v777 = vsub.f32 %v681, %v700
      %v778 = vsub.f32 %v682, %v705
      %v779 = vsub.f32 %v683, %v710
      %v780 = vsub.f32 %v684, %v715
      %v781 = vsub.f32 %v685, %v720
      %v782 = vsub.f32 %v686, %v725
      %v783 = vsub.f32 %v687, %v730
      %v784 = vsub.f32 %v688, %v735
      %v785 = vsub.f32 %v689, %v740
      %v786 = vsub.f32 %v690, %v745
      %v787 = vsub.f32 %v691, %v750
      %v788 = vsub.f32 %v692, %v755
      %v789 = vsub.f32 %v693, %v760
      %v790 = vsub.f32 %v694, %v765
      %v791 = vsub.f32 %v695, %v770
      %v792 = vsub.f32 %v696, %v775
      %793 = vst [vmem:[#allocation9] sm:$0xff] %v777
      %794 = vst [vmem:[#allocation9 + $0x8] sm:$0xff] %v778
      %795 = vst [vmem:[#allocation9 + $0x10] sm:$0xff] %v779
      %796 = vst [vmem:[#allocation9 + $0x18] sm:$0xff] %v780
      %797 = vst [vmem:[#allocation9 + $0x20] sm:$0xff] %v781
      %798 = vst [vmem:[#allocation9 + $0x28] sm:$0xff] %v782
      %799 = vst [vmem:[#allocation9 + $0x30] sm:$0xff] %v783
      %800 = vst [vmem:[#allocation9 + $0x38] sm:$0xff] %v784
      %801 = vst [vmem:[#allocation9 + $0x40] sm:$0xff] %v785
      %802 = vst [vmem:[#allocation9 + $0x48] sm:$0xff] %v786
      %803 = vst [vmem:[#allocation9 + $0x50] sm:$0xff] %v787
      %804 = vst [vmem:[#allocation9 + $0x58] sm:$0xff] %v788
      %805 = vst [vmem:[#allocation9 + $0x60] sm:$0xff] %v789
      %806 = vst [vmem:[#allocation9 + $0x68] sm:$0xff] %v790
      %807 = vst [vmem:[#allocation9 + $0x70] sm:$0xff] %v791
      %808 = vst [vmem:[#allocation9 + $0x78] sm:$0xff] %v792
    $region29: #{tpu_custom_call.1} parent=1 // pred_fallthru
      _
    // Predicated region
    $region30: #{tpu_custom_call.1} parent=1 // pred_check
      _
    $region31: #{tpu_custom_call.1} parent=1 // pred_check_branch
      %810 = sbr.rel (0) target = $region33
    $region32: #{tpu_custom_call.1} parent=1 // pred_region
      %812 = vsyncadd [#allocation6], 0
      %s813 = sshll.u32 [#allocation9], 4
      %s814 = int_to_ptr.vmem [resolvable:$true] %s813
      %s815 = sshll.u32 %s3, 4
      %s816 = int_to_ptr.hbm [resolvable:$true] %s815
      %821 = dma.vmem_to_hbm [thread:$0]  %s814, 2048, %s816, [#allocation6], 128, 128, 8
    $region33: #{tpu_custom_call.1} parent=1 // pred_fallthru
      _
    // Predicated region
    $region34: #{tpu_custom_call.1} parent=1 // pred_check
      _
    $region35: #{tpu_custom_call.1} parent=1 // pred_check_branch
      %823 = sbr.rel (0) target = $region37
    $region36: #{tpu_custom_call.1} parent=1 // pred_region
      %825 = dma.done [#allocation6], 2048
    $region37: #{tpu_custom_call.1} parent=1 // pred_fallthru
      _
    %826 = vsyncpa [#allocation5], 1
    %827 = vsyncpa [#allocation8], 1
    %828 = vsyncpa [#allocation6], 1

</llo_original>
